<compile_context>
chip_gen: v7x
topology: tpu7x:2x2x1
jax: 0.10.0
libtpu: 0.0.40
codegen_flags: <defaults>
</compile_context>

<pallas_src>
import jax
import jax.numpy as jnp
from jax.experimental import pallas as pl
from jax.experimental.pallas import tpu as pltpu


def _round_up(x, m):
    return ((x + m - 1) // m) * m


def _vmem_capacity_bytes():
    try:
        return int(pltpu.get_tpu_info().vmem_capacity_bytes)
    except Exception:
        return 64 * 1024 * 1024  # v7x floor; v5e/v6e have 128 MiB


# ----------------------------------------------------------------------------
# Pallas kernels
# ----------------------------------------------------------------------------
def _cat_net_masked_kernel(x_ref, w_ref, b_ref, m_ref, o_ref):
    # logits = x @ W_t + b   (W_t already (K, N): no per-tile transpose)
    logits = jnp.dot(x_ref[...], w_ref[...],
                     preferred_element_type=jnp.float32) + b_ref[...]
    mx = jnp.max(logits, axis=-1, keepdims=True)          # stable softmax
    # fused: softmax -> mask -> Categorical renormalization
    e = jnp.exp(logits - mx) * m_ref[...].astype(jnp.float32)
    denom = jnp.sum(e, axis=-1, keepdims=True)
    # all-masked row -> zeros (never 0 * inf = NaN); exact reciprocal so rows
    # sum to 1 to f32 precision (cheap: (TB, 1) vector on the EUP).
    inv = pl.reciprocal(jnp.where(denom > 0.0, denom, 1.0), approx=False)
    o_ref[...] = (e * inv).astype(o_ref.dtype)


def _cat_net_nomask_kernel(x_ref, w_ref, b_ref, o_ref):
    logits = jnp.dot(x_ref[...], w_ref[...],
                     preferred_element_type=jnp.float32) + b_ref[...]
    mx = jnp.max(logits, axis=-1, keepdims=True)
    e = jnp.exp(logits - mx)
    denom = jnp.sum(e, axis=-1, keepdims=True)             # >= 1, no guard needed
    o_ref[...] = (e * pl.reciprocal(denom, approx=False)).astype(o_ref.dtype)


# ----------------------------------------------------------------------------
# Wrapper
# ----------------------------------------------------------------------------
def categorical_net_forward(features, weight_t, bias, action_maps=None,
                            masking=True):
    """Returns normalized (masked) probs.

    weight_t: PRE-TRANSPOSED linear weight, shape (num_inputs, num_outputs).
    """
    B, K = features.shape
    k2, N = weight_t.shape
    assert k2 == K

    # MXU-native bf16 operands (f32 accumulation inside the kernel); halves the
    # dominant feature/mask DMA streams.
    x = features.astype(jnp.bfloat16)
    w = weight_t.astype(jnp.bfloat16)
    b2d = bias.reshape(1, N).astype(jnp.float32)

    # ---- batch tile from a per-generation VMEM budget -----------------------
    per_row = 2 * (K * 2 + N * 4 + (N * 2 if masking else 0))   # double-buffered
    fixed = 2 * (K * N * 2 + N * 4)                             # weight + bias
    vmem_cap = _vmem_capacity_bytes()
    budget = int(vmem_cap * 0.6)
    tb_cap = max(16, ((budget - fixed) // max(per_row, 1)) // 16 * 16)

    if B <= 16:
        TB = B                                     # single full block
    else:
        # >= 2 grid steps so ("parallel",) can shard tiles across v7x's 2 TCs.
        two_way = _round_up(pl.cdiv(B, 2), 16)
        TB = max(16, min(tb_cap, 1024, two_way))
    grid = (pl.cdiv(B, TB),)

    vmem_limit = int(min(vmem_cap * 0.875,
                         max(32 * 1024 * 1024, fixed + per_row * TB + (4 << 20))))

    x_spec = pl.BlockSpec((TB, K), lambda i: (i, 0))
    w_spec = pl.BlockSpec((K, N), lambda i: (0, 0))    # resident, constant index
    b_spec = pl.BlockSpec((1, N), lambda i: (0, 0))
    o_spec = pl.BlockSpec((TB, N), lambda i: (i, 0))

    compiler_params = pltpu.CompilerParams(
        dimension_semantics=("parallel",), vmem_limit_bytes=vmem_limit)

    out_shape = jax.ShapeDtypeStruct((B, N), jnp.float32)
    flops = 2 * B * K * N
    transcendentals = B * N
    base_bytes = B * K * 2 + K * N * 2 + N * 4 + B * N * 4

    if masking:
        # binary mask -> bf16: 2 B/elem DMA instead of 4, exact for {0, 1}.
        mask = action_maps.reshape(B, -1).astype(jnp.bfloat16)
        return pl.pallas_call(
            _cat_net_masked_kernel,
            out_shape=out_shape,
            grid=grid,
            in_specs=[x_spec, w_spec, b_spec,
                      pl.BlockSpec((TB, N), lambda i: (i, 0))],
            out_specs=o_spec,
            compiler_params=compiler_params,
            cost_estimate=pl.CostEstimate(flops=flops,
                                          transcendentals=transcendentals,
                                          bytes_accessed=base_bytes + B * N * 2),
        )(x, w, b2d, mask)

    # masking=False: no mask materialization or DMA at all.
    return pl.pallas_call(
        _cat_net_nomask_kernel,
        out_shape=out_shape,
        grid=grid,
        in_specs=[x_spec, w_spec, b_spec],
        out_specs=o_spec,
        compiler_params=compiler_params,
        cost_estimate=pl.CostEstimate(flops=flops,
                                      transcendentals=transcendentals,
                                      bytes_accessed=base_bytes),
    )(x, w, b2d)


# ----------------------------------------------------------------------------
# CustomFixedCategorical equivalent — probs are ALREADY normalized in-kernel.
# ----------------------------------------------------------------------------
class CustomFixedCategorical:
    def __init__(self, probs):
        self.probs = probs

    def mode(self):
        return jnp.argmax(self.probs, axis=-1, keepdims=True)

    def log_probs(self, actions):
        logp = jnp.log(self.probs)      # masked entries -> -inf (PyTorch parity)
        a = actions.squeeze(-1)
        gathered = jnp.take_along_axis(logp, a[..., None], axis=-1).squeeze(-1)
        return gathered.reshape(actions.shape[0], -1).sum(-1)[..., None]

    def sample(self, key):
        return jax.random.categorical(key, jnp.log(self.probs), axis=-1)[..., None]


# ----------------------------------------------------------------------------
# Parameter init (mirrors nn.init.orthogonal_(gain=0.01), bias = 0).
# ----------------------------------------------------------------------------
def init_params(key, num_inputs, num_outputs, gain=0.01):
    rows, cols = num_outputs, num_inputs
    a = jax.random.normal(key, (max(rows, cols), min(rows, cols)),
                          dtype=jnp.float32)
    q, r = jnp.linalg.qr(a)
    q = q * jnp.sign(jnp.diagonal(r))
    if rows < cols:
        q = q.T
    weight = gain * q[:rows, :cols]                    # (num_outputs, num_inputs)
    bias = jnp.zeros((num_outputs,), dtype=jnp.float32)
    return weight, bias


class CategoricalNetWithMask:
    def __init__(self, num_inputs, num_outputs, masking, key):
        self.masking = masking
        self.weight, self.bias = init_params(key, num_inputs, num_outputs)
        # One-time layout/precision prep (done at parameter-build time, never
        # per call): (K, N) bf16 weight for the kernel.
        self.weight_t = jnp.asarray(self.weight.T, dtype=jnp.bfloat16)

    def __call__(self, features, action_maps):
        probs = categorical_net_forward(
            features, self.weight_t, self.bias, action_maps, self.masking)
        return CustomFixedCategorical(probs=probs)


if __name__ == "__main__":
    key = jax.random.PRNGKey(0)
    k_feat, k_mask, k_param = jax.random.split(key, 3)

    B = 8
    num_inputs = 32
    map_h = map_w = 4
    num_outputs = map_h * map_w  # 16

    features = jax.random.normal(k_feat, (B, num_inputs), dtype=jnp.float32)
    # binary action maps (B, 4, 4); guarantee >=1 valid action per row so the
    # distribution is well defined (same requirement as the PyTorch original)
    action_maps = (jax.random.uniform(k_mask, (B, map_h, map_w)) > 0.3).astype(
        jnp.int32)
    action_maps = action_maps.at[:, 0, 0].set(1)

    net = CategoricalNetWithMask(num_inputs, num_outputs, masking=True,
                                 key=k_param)
    dist = net(features, action_maps)

    probs = jax.block_until_ready(dist.probs)
    mode = jax.block_until_ready(dist.mode())

    # --- checks against plain-JAX f32 reference ---
    mask_flat = action_maps.reshape(B, -1)
    logits_ref = features @ net.weight.T + net.bias
    p_ref = jax.nn.softmax(logits_ref, axis=-1) * mask_flat.astype(jnp.float32)
    p_ref = p_ref / jnp.sum(p_ref, axis=-1, keepdims=True)

    assert probs.shape == (B, num_outputs)
    assert bool(jnp.all(jnp.isfinite(probs)))
    assert bool(jnp.allclose(jnp.sum(probs, axis=-1), 1.0, atol=1e-3))
    assert bool(jnp.all(jnp.where(mask_flat == 0, probs, 0.0) == 0.0))
    assert bool(jnp.allclose(probs, p_ref, atol=2e-3))
    assert mode.shape == (B, 1)

    # masking=False path (no mask DMA at all)
    net2 = CategoricalNetWithMask(num_inputs, num_outputs, masking=False,
                                  key=k_param)
    p2 = jax.block_until_ready(net2(features, action_maps).probs)
    assert bool(jnp.allclose(p2, jax.nn.softmax(logits_ref, axis=-1),
                             atol=2e-3))

    print("KERNEL_OK")
</pallas_src>

<mosaic_0001>
module attributes {stable_mosaic.version = 11 : i64} {
  func.func @_cat_net_masked_kernel(%arg0: i32, %arg1: memref<8x32xbf16, #tpu.memory_space<vmem>>, %arg2: memref<32x16xbf16, #tpu.memory_space<vmem>>, %arg3: memref<1x16xf32, #tpu.memory_space<vmem>>, %arg4: memref<8x16xbf16, #tpu.memory_space<vmem>>, %arg5: memref<8x16xf32, #tpu.memory_space<vmem>>) attributes {dimension_semantics = [#tpu.dimension_semantics<parallel>], iteration_bounds = array<i64: 1>, scalar_prefetch = 0 : i64, scratch_operands = 0 : i64, tpu.core_type = #tpu.core_type<tc>, window_params = [{transform_indices = @transform_0, window_bounds = array<i64: 8, 32>}, {pipeline_mode = #tpu.pipeline_mode<synchronous>, transform_indices = @transform_1, window_bounds = array<i64: 32, 16>}, {pipeline_mode = #tpu.pipeline_mode<synchronous>, transform_indices = @transform_2, window_bounds = array<i64: 1, 16>}, {transform_indices = @transform_3, window_bounds = array<i64: 8, 16>}, {transform_indices = @transform_4, window_bounds = array<i64: 8, 16>}]} {
    %c0 = arith.constant 0 : index
    %c0_0 = arith.constant 0 : index
    %0 = vector.load %arg1[%c0, %c0_0] : memref<8x32xbf16, #tpu.memory_space<vmem>>, vector<8x32xbf16>
    %c0_1 = arith.constant 0 : index
    %c0_2 = arith.constant 0 : index
    %1 = vector.load %arg2[%c0_1, %c0_2] : memref<32x16xbf16, #tpu.memory_space<vmem>>, vector<32x16xbf16>
    %cst = arith.constant dense<0.000000e+00> : vector<8x16xf32>
    %2 = tpu.matmul %0, %1, %cst {dimension_numbers = #tpu.dot_dimension_numbers<[1], [0], [0], [1], [0, 0, 1, 1], [], []>} : vector<8x32xbf16>, vector<32x16xbf16>, vector<8x16xf32> -> vector<8x16xf32>
    %c0_3 = arith.constant 0 : index
    %c0_4 = arith.constant 0 : index
    %3 = vector.load %arg3[%c0_3, %c0_4] : memref<1x16xf32, #tpu.memory_space<vmem>>, vector<1x16xf32>
    %4 = vector.broadcast %3 : vector<1x16xf32> to vector<8x16xf32>
    %5 = arith.addf %2, %4 : vector<8x16xf32>
    %cst_5 = arith.constant dense<0xFF800000> : vector<8xf32>
    %6 = vector.multi_reduction <maximumf>, %5, %cst_5 [1] : vector<8x16xf32> to vector<8xf32>
    %7 = vector.shape_cast %6 : vector<8xf32> to vector<8x1xf32>
    %8 = vector.broadcast %7 : vector<8x1xf32> to vector<8x16xf32>
    %9 = arith.subf %5, %8 : vector<8x16xf32>
    %10 = math.exp %9 : vector<8x16xf32>
    %c0_6 = arith.constant 0 : index
    %c0_7 = arith.constant 0 : index
    %11 = vector.load %arg4[%c0_6, %c0_7] : memref<8x16xbf16, #tpu.memory_space<vmem>>, vector<8x16xbf16>
    %12 = arith.extf %11 : vector<8x16xbf16> to vector<8x16xf32>
    %13 = arith.mulf %10, %12 : vector<8x16xf32>
    %cst_8 = arith.constant dense<0.000000e+00> : vector<8xf32>
    %14 = vector.multi_reduction <add>, %13, %cst_8 [1] : vector<8x16xf32> to vector<8xf32>
    %15 = vector.shape_cast %14 : vector<8xf32> to vector<8x1xf32>
    %cst_9 = arith.constant 0.000000e+00 : f32
    %16 = vector.broadcast %cst_9 : f32 to vector<8x1xf32>
    %17 = arith.cmpf ogt, %15, %16 : vector<8x1xf32>
    %cst_10 = arith.constant 1.000000e+00 : f32
    %18 = vector.broadcast %cst_10 : f32 to vector<8x1xf32>
    %19 = arith.select %17, %15, %18 : vector<8x1xi1>, vector<8x1xf32>
    %20 = tpu.reciprocal %19 : vector<8x1xf32> -> vector<8x1xf32>
    %21 = vector.broadcast %20 : vector<8x1xf32> to vector<8x16xf32>
    %22 = arith.mulf %13, %21 : vector<8x16xf32>
    %c0_11 = arith.constant 0 : index
    %c0_12 = arith.constant 0 : index
    %23 = vector.load %arg5[%c0_11, %c0_12] : memref<8x16xf32, #tpu.memory_space<vmem>>, vector<8x16xf32>
    tpu.vector_store %arg5[%c0_11, %c0_12], %22 {strides = array<i32>} : memref<8x16xf32, #tpu.memory_space<vmem>>, vector<8x16xf32>,
    return
  }
  func.func @transform_0(%arg0: i32) -> (i32, i32) {
    %c0_i32 = arith.constant 0 : i32
    %c0_i32_0 = arith.constant 0 : i32
    return %arg0, %c0_i32 : i32, i32
  }
  func.func @transform_1(%arg0: i32) -> (i32, i32) {
    %c0_i32 = arith.constant 0 : i32
    %c0_i32_0 = arith.constant 0 : i32
    %c0_i32_1 = arith.constant 0 : i32
    return %c0_i32, %c0_i32_0 : i32, i32
  }
  func.func @transform_2(%arg0: i32) -> (i32, i32) {
    %c0_i32 = arith.constant 0 : i32
    %c0_i32_0 = arith.constant 0 : i32
    %c0_i32_1 = arith.constant 0 : i32
    return %c0_i32, %c0_i32_0 : i32, i32
  }
  func.func @transform_3(%arg0: i32) -> (i32, i32) {
    %c0_i32 = arith.constant 0 : i32
    %c0_i32_0 = arith.constant 0 : i32
    return %arg0, %c0_i32 : i32, i32
  }
  func.func @transform_4(%arg0: i32) -> (i32, i32) {
    %c0_i32 = arith.constant 0 : i32
    %c0_i32_0 = arith.constant 0 : i32
    return %arg0, %c0_i32 : i32, i32
  }
}

</mosaic_0001>

<llo_original>
// kernel: tpu_custom_call.1
$region0: #{tpu_custom_call.1}
  #allocation0 [shape = 'u32[]', space=smem, size = 0x4, offset = 0x4, fixed_abs, tag = 'smem constant byte address 0x4 - core index']
  #allocation1 [shape = 'u32[144,128]{1,0:T(1,128)}', space=vmem, size = 0x12000, scoped, tag = 'internal scratch']
  %s0 = inlined_call_operand.vmem [shape: bf16[8,32], index: 0, kind: input, shape index: {}]
  %s1 = inlined_call_operand.vmem [shape: bf16[32,16], index: 1, kind: input, shape index: {}]
  %s2 = inlined_call_operand.vmem [shape: f32[1,16], index: 2, kind: input, shape index: {}]
  %s3 = inlined_call_operand.vmem [shape: bf16[8,16], index: 3, kind: input, shape index: {}]
  %s4 = inlined_call_operand.hbm [shape: f32[8,16], index: 4, kind: output, shape index: {}]
  %s5 = sld [smem:[#allocation0]]
  $region26: #{tpu_custom_call.1} parent=0
    _
  %s7 = ssub.s32 1, %s5
  %s8 = scalar_select 0, %s7, %s5
  $region1: #{tpu_custom_call.1} parent=0
    #allocation2 [shape = 'u8[4096]{0}', space=vmem, size = 0x1000, scoped, tag = 'output window, operand 0, single buffered']
    #allocation3 [shape = 's32[1]{0}', space=sflag, size = 0x4, scoped, tag = 'scoped memory for tpu_custom_call.1']
    %9 = vsyncpa [#allocation3], 0
    // Predicated region
    $region2: #{tpu_custom_call.1} parent=1 // pred_check
      _
    $region3: #{tpu_custom_call.1} parent=1 // pred_check_branch
      %11 = sbr.rel (0) target = $region5
    $region4: #{tpu_custom_call.1} parent=1 // pred_region
      _
    $region5: #{tpu_custom_call.1} parent=1 // pred_fallthru
      _
    // Predicated region
    $region6: #{tpu_custom_call.1} parent=1 // pred_check
      _
    $region7: #{tpu_custom_call.1} parent=1 // pred_check_branch
      %13 = sbr.rel (0) target = $region9
    $region8: #{tpu_custom_call.1} parent=1 // pred_region
      _
    $region9: #{tpu_custom_call.1} parent=1 // pred_fallthru
      _
    // Predicated region
    $region10: #{tpu_custom_call.1} parent=1 // pred_check
      _
    $region11: #{tpu_custom_call.1} parent=1 // pred_check_branch
      %15 = sbr.rel (0) target = $region13
    $region12: #{tpu_custom_call.1} parent=1 // pred_region
      _
    $region13: #{tpu_custom_call.1} parent=1 // pred_fallthru
      _
    // Predicated region
    $region14: #{tpu_custom_call.1} parent=1 // pred_check
      _
    $region15: #{tpu_custom_call.1} parent=1 // pred_check_branch
      %17 = sbr.rel (0) target = $region17
    $region16: #{tpu_custom_call.1} parent=1 // pred_region
      _
    $region17: #{tpu_custom_call.1} parent=1 // pred_fallthru
      _
    %v19 = vld [vmem:[%s0] sm:$0xf]
    %v20 = vld [vmem:[%s1] sm:$0xf]
    %v21 = vld [vmem:[%s1 + $0x4] sm:$0xf]
    %v22 = vld [vmem:[%s1 + $0x8] sm:$0xf]
    %v23 = vld [vmem:[%s1 + $0xc] sm:$0xf]
    %v24 = vld [vmem:[%s2] sm:$0x1]
    %v26 = vlaneseq
    %v27 = vshrl.u32 %v26, 7
    %v28 = vsub.s32 0, %v27
    %v29 = vrot.slane %v24, %v28
    %v35 = vunpack.c.l.b16 %v20
    %v36 = vunpack.c.l.b16 %v21
    %v37 = vunpack.c.l.b16 %v22
    %v38 = vunpack.c.l.b16 %v23
    %v39 = vpack.c.b16 %v36, %v35
    %v40 = vpack.c.b16 %v38, %v37
    %vm43 = vcmask 261120
    %v45 = vsel %vm43, %v19, 0
    %47 = vmatprep.subr.bf16.mxu0 0
    %48 = vmatpush1.bf16.msra.mxu0 %v39
    %49 = vmatprep.subr.bf16.mxu0 0
    %50 = vmatpush1.bf16.msra.mxu0 %v40
    %51 = vmatprep.subr.bf16.mxu0 0
    %52 = vmatpush1.bf16.msra.mxu0 0
    %53 = vmatprep.subr.bf16.mxu0 0
    %54 = vmatpush1.bf16.msra.mxu0 0
    %55 = vmatprep.subr.bf16.mxu0 0
    %56 = vmatpush1.bf16.msra.mxu0 0
    %57 = vmatprep.subr.bf16.mxu0 0
    %58 = vmatpush1.bf16.msra.mxu0 0
    %59 = vmatprep.subr.bf16.mxu0 0
    %60 = vmatpush1.bf16.msra.mxu0 0
    %61 = vmatprep.subr.bf16.mxu0 0
    %62 = vmatpush1.bf16.msra.mxu0 0
    %63 = vmatprep.subr.bf16.mxu0 0
    %64 = vmatpush1.bf16.msra.mxu0 0
    %65 = vmatprep.subr.bf16.mxu0 0
    %66 = vmatpush1.bf16.msra.mxu0 0
    %67 = vmatprep.subr.bf16.mxu0 0
    %68 = vmatpush1.bf16.msra.mxu0 0
    %69 = vmatprep.subr.bf16.mxu0 0
    %70 = vmatpush1.bf16.msra.mxu0 0
    %71 = vmatprep.subr.bf16.mxu0 0
    %72 = vmatpush1.bf16.msra.mxu0 0
    %73 = vmatprep.subr.bf16.mxu0 0
    %74 = vmatpush1.bf16.msra.mxu0 0
    %75 = vmatprep.subr.bf16.mxu0 0
    %76 = vmatpush1.bf16.msra.mxu0 0
    %77 = vmatprep.subr.bf16.mxu0 0
    %78 = vmatpush1.bf16.msra.mxu0 0
    %79 = vmatprep.mubr.bf16.mxu0 0
    %80 = vmatmul.mubr.bf16.gmra.mrb[0].mxu0 %v45
    %v81 = vpop.f32.mrb[0].mxu0
    %v82 = vadd.f32 %v29, %v81
    %v83 = vpop.f32.mrb[0].mxu0
    %v84 = vpop.f32.mrb[0].mxu0
    %v85 = vpop.f32.mrb[0].mxu0
    %86 = vdwg.mxu0
    %vm87 = vcmask 130048
    %v88 = vsel %vm87, %v82, -inf
    %89 = vmax.xlane.f32.xlu0 %v88
    %v90 = vpop.xlane.xlu0 %89
    %v91 = vsub.f32 %v82, %v90
    %v92 = vmul.f32 %v91, 1.442695
    %v93 = vpow.pop %v92
    %v94 = vld [vmem:[%s3] sm:$0xf]
    %v95 = vunpack.c.l.bf16 %v94
    %v96 = vmul.f32 %v93, %v95
    %v97 = vsel %vm87, %v96, 0.0
    %98 = vadd.xlane.f32.xlu0 %v97
    %v99 = vpop.xlane.xlu0 %98
    %vm100 = vcmp.gt.f32.partialorder %v99, 0.0
    %v101 = vsel %vm100, %v99, 1.0
    %v102 = vrcp.pop %v101
    %v103 = vmul.f32 %v96, %v102
    %104 = vst.msk [vmem:[#allocation2] sm:$0xff] %vm87, %v103
    // Predicated region
    $region18: #{tpu_custom_call.1} parent=1 // pred_check
      _
    $region19: #{tpu_custom_call.1} parent=1 // pred_check_branch
      %106 = sbr.rel (0) target = $region21
    $region20: #{tpu_custom_call.1} parent=1 // pred_region
      %s108 = ssub.s32 128, 128
      %109 = vsyncadd [#allocation3], %s108
      %s111 = sshll.u32 [#allocation2], 4
      %s112 = int_to_ptr.vmem [resolvable:$true] %s111
      %114 = dma.vmem_to_hbm [thread:$0]  %s112, 128, %s4, [#allocation3]
    $region21: #{tpu_custom_call.1} parent=1 // pred_fallthru
      _
    // Predicated region
    $region22: #{tpu_custom_call.1} parent=1 // pred_check
      _
    $region23: #{tpu_custom_call.1} parent=1 // pred_check_branch
      %116 = sbr.rel (0) target = $region25
    $region24: #{tpu_custom_call.1} parent=1 // pred_region
      %117 = dma.done [#allocation3], 128
    $region25: #{tpu_custom_call.1} parent=1 // pred_fallthru
      _
    %118 = vsyncpa [#allocation3], 1

</llo_original>
